<compile_context>
chip_gen: v7x
topology: tpu7x:2x2x1
jax: 0.10.0
libtpu: 0.0.40
codegen_flags: <defaults>
</compile_context>

<pallas_src>
import math

import jax
import jax.numpy as jnp
from jax import lax
from jax.experimental import pallas as pl
from jax.experimental.pallas import tpu as pltpu

ANGLE = 0.506145
YSCALE = math.sin(-ANGLE)   # matches Model.__init__: self.yscale
ZSCALE = math.cos(ANGLE)    # matches Model.__init__: self.zscale


# --------------------------------------------------------------------------
# Fused kernel: scene-vertex construction (step 0) + streaming loss reduction
# --------------------------------------------------------------------------
def _make_fused_kernel(vt: int, vc: int, n_channels: int):
    def kernel(param_ref, test_ref, cow_ref, img_ref,
               scene_ref, loss_ref, acc_ref):
        i = pl.program_id(0)

        # ---- step 0: init lane-wise accumulator + write scene vertices ----
        @pl.when(i == 0)
        def _():
            acc_ref[...] = jnp.zeros_like(acc_ref)

            # test_mesh vertices pass through unchanged (join_meshes_as_scene)
            scene_ref[pl.ds(0, vt), :] = test_ref[...]

            # cowTranslation = [t0, t1*yscale, t1*zscale], broadcast over verts
            # TODO(synk): (V, 3) layout uses 3/128 lanes; fine at toy vertex
            # counts, restructure lane-dense if V grows to 1e5+.
            t0 = param_ref[0]
            t1 = param_ref[1]
            col = lax.broadcasted_iota(jnp.int32, (vc, 3), 1)
            trans = jnp.where(col == 0, t0,
                              jnp.where(col == 1, t1 * YSCALE, t1 * ZSCALE))
            scene_ref[pl.ds(vt, vc), :] = cow_ref[...] + trans

        # ---- steady state: pure vld + VPU adds into (8, W*C) partials ----
        x = img_ref[...]                        # (tile_g, 8, W*C), lane-dense
        if x.dtype != jnp.float32:              # trace-time branch only
            x = x.astype(jnp.float32)
        acc_ref[...] += jnp.sum(x, axis=0)      # cross-vreg adds, no XLU

        # ---- epilogue: per-lane channel weight + single cross-lane reduce ----
        @pl.when(i == pl.num_programs(0) - 1)
        def _():
            lane = lax.broadcasted_iota(jnp.int32, acc_ref.shape, 1)
            # loss = sum(-R - G - B): weight -1 on channels 0..2, 0 otherwise
            weight = jnp.where((lane % n_channels) < 3, -1.0, 0.0)
            loss_ref[0, 0] = jnp.sum(acc_ref[...] * weight)

    return kernel


def model_forward(cow_world_translation, cow_verts, test_verts, rendered_image,
                  *, max_block_bytes: int = 4 * 1024 * 1024):
    """Forward pass of Model: returns (loss, image, scene_vertices)."""
    vt, cdim = test_verts.shape
    vc, _ = cow_verts.shape
    assert cdim == 3
    assert vt % 8 == 0, "test-mesh vertex count must be a multiple of 8"

    n, h, w, c = rendered_image.shape
    assert c >= 3, "loss needs at least 3 channels (R, G, B)"
    assert h % 8 == 0, "image height must be a multiple of 8 (sublane)"
    wc = w * c

    # Free contiguous reshape: 8-row sublane groups, channels fold into lanes.
    img = rendered_image.reshape(n, h // 8, 8, wc)

    # Largest group count whose block stays under the budget (double-buffered
    # by the pipeline).  tile_g=1 always divides, so no whole-image fallback.
    # NOTE(v7x): for very large frames, add a leading "parallel" grid axis
    # splitting H across the 2 TensorCores with per-chunk partial outputs.
    groups = h // 8
    bytes_per_group = 8 * wc * jnp.dtype(img.dtype).itemsize
    max_groups = max(1, max_block_bytes // bytes_per_group)
    tile_g = max(d for d in range(1, groups + 1)
                 if groups % d == 0 and d <= max_groups)
    grid = (groups // tile_g,)

    kernel = _make_fused_kernel(vt, vc, c)

    scene, loss = pl.pallas_call(
        kernel,
        out_shape=(
            jax.ShapeDtypeStruct((vt + vc, 3), cow_verts.dtype),  # scene verts
            jax.ShapeDtypeStruct((1, 1), jnp.float32),            # scalar loss
        ),
        grid_spec=pltpu.PrefetchScalarGridSpec(
            num_scalar_prefetch=0,
            grid=grid,
            in_specs=[
                pl.BlockSpec(memory_space=pltpu.MemorySpace.SMEM),  # (2,) param
                pl.BlockSpec(memory_space=pltpu.MemorySpace.VMEM),  # test verts
                pl.BlockSpec(memory_space=pltpu.MemorySpace.VMEM),  # cow verts
                # Unit batch dim squeezed & pinned to 0: only image[0]'s rows
                # are ever DMA'd; kernel ref is (tile_g, 8, W*C).
                pl.BlockSpec((pl.Squeezed(), tile_g, 8, wc),
                             lambda i: (0, i, 0, 0)),
            ],
            out_specs=(
                pl.BlockSpec((vt + vc, 3), lambda i: (0, 0)),       # resident
                pl.BlockSpec(memory_space=pltpu.MemorySpace.SMEM),  # scalar out
            ),
            scratch_shapes=[pltpu.VMEM((8, wc), jnp.float32)],      # lane partials
        ),
        compiler_params=pltpu.CompilerParams(
            dimension_semantics=("arbitrary",)),
    )(cow_world_translation, test_verts, cow_verts, img)

    # TODO(synk): self.renderer(meshes_world=mesh) (MeshRasterizer +
    # SoftPhongShader) is not translatable to Pallas; `rendered_image` is a
    # deterministic stand-in with the renderer's (N, H, W, 4) RGBA layout.
    return loss[0, 0], rendered_image, scene


if __name__ == "__main__":
    key = jax.random.PRNGKey(0)
    k1, k2, k3, k4 = jax.random.split(key, 4)

    V_COW, V_TEST = 64, 96
    N, H, W, C = 1, 128, 128, 4

    cow_world_translation = jax.random.normal(k1, (2,), dtype=jnp.float32)
    cow_verts = jax.random.normal(k2, (V_COW, 3), dtype=jnp.float32)
    test_verts = jax.random.normal(k3, (V_TEST, 3), dtype=jnp.float32)
    rendered_image = jax.random.uniform(k4, (N, H, W, C), dtype=jnp.float32)

    loss, image, sverts = model_forward(
        cow_world_translation, cow_verts, test_verts, rendered_image)
    jax.block_until_ready((loss, image, sverts))

    # Pure-JAX reference check for the Pallas pieces.
    trans_ref = jnp.stack([cow_world_translation[0],
                           cow_world_translation[1] * YSCALE,
                           cow_world_translation[1] * ZSCALE])
    cow_ref = cow_verts + trans_ref[None, :]
    loss_ref = jnp.sum(-rendered_image[0, :, :, 1]
                       - rendered_image[0, :, :, 2]
                       - rendered_image[0, :, :, 0])
    assert jnp.allclose(sverts[:V_TEST], test_verts, atol=1e-6, rtol=1e-6)
    assert jnp.allclose(sverts[V_TEST:], cow_ref, atol=1e-5, rtol=1e-5)
    assert jnp.allclose(loss, loss_ref, atol=1e-2, rtol=1e-5)

    print("KERNEL_OK")
</pallas_src>

<mosaic_0001>
module attributes {stable_mosaic.version = 11 : i64} {
  func.func @kernel(%arg0: i32, %arg1: memref<2xf32, #tpu.memory_space<smem>>, %arg2: memref<96x3xf32, #tpu.memory_space<vmem>>, %arg3: memref<64x3xf32, #tpu.memory_space<vmem>>, %arg4: memref<1x16x8x512xf32, #tpu.memory_space<vmem>>, %arg5: memref<160x3xf32, #tpu.memory_space<vmem>>, %arg6: memref<1x1xf32, #tpu.memory_space<smem>>, %arg7: memref<8x512xf32, #tpu.memory_space<vmem>>) attributes {dimension_semantics = [#tpu.dimension_semantics<arbitrary>], iteration_bounds = array<i64: 1>, scalar_prefetch = 0 : i64, scratch_operands = 1 : i64, tpu.core_type = #tpu.core_type<tc>, window_params = [{transform_indices = @transform_0, window_bounds = array<i64: 2>}, {pipeline_mode = #tpu.pipeline_mode<synchronous>, transform_indices = @transform_1, window_bounds = array<i64: 96, 3>}, {pipeline_mode = #tpu.pipeline_mode<synchronous>, transform_indices = @transform_2, window_bounds = array<i64: 64, 3>}, {transform_indices = @transform_3, window_bounds = array<i64: 1, 16, 8, 512>}, {pipeline_mode = #tpu.pipeline_mode<synchronous>, transform_indices = @transform_4, window_bounds = array<i64: 160, 3>}, {transform_indices = @transform_5, window_bounds = array<i64: 1, 1>}]} {
    %c0_i32 = arith.constant 0 : i32
    %0 = arith.cmpi eq, %arg0, %c0_i32 : i32
    %1 = arith.extui %0 : i1 to i32
    %c0_i32_0 = arith.constant 0 : i32
    %2 = arith.cmpi ne, %1, %c0_i32_0 : i32
    scf.if %2 {
      %cst_10 = arith.constant 0.000000e+00 : f32
      %12 = vector.broadcast %cst_10 : f32 to vector<8x512xf32>
      %c0_11 = arith.constant 0 : index
      %c0_12 = arith.constant 0 : index
      %13 = vector.load %arg7[%c0_11, %c0_12] : memref<8x512xf32, #tpu.memory_space<vmem>>, vector<8x512xf32>
      tpu.vector_store %arg7[%c0_11, %c0_12], %12 {strides = array<i32>} : memref<8x512xf32, #tpu.memory_space<vmem>>, vector<8x512xf32>,
      %c0_13 = arith.constant 0 : index
      %c0_14 = arith.constant 0 : index
      %14 = vector.load %arg2[%c0_13, %c0_14] : memref<96x3xf32, #tpu.memory_space<vmem>>, vector<96x3xf32>
      %c0_15 = arith.constant 0 : index
      %c0_16 = arith.constant 0 : index
      %15 = vector.load %arg5[%c0_15, %c0_16] : memref<160x3xf32, #tpu.memory_space<vmem>>, vector<96x3xf32>
      tpu.vector_store %arg5[%c0_15, %c0_16], %14 {strides = array<i32>} : memref<160x3xf32, #tpu.memory_space<vmem>>, vector<96x3xf32>,
      %c0_17 = arith.constant 0 : index
      %16 = memref.load %arg1[%c0_17] : memref<2xf32, #tpu.memory_space<smem>>
      %c1 = arith.constant 1 : index
      %17 = memref.load %arg1[%c1] : memref<2xf32, #tpu.memory_space<smem>>
      %18 = tpu.iota {dimensions = array<i32: 1>} : vector<64x3xi32>
      %c0_i32_18 = arith.constant 0 : i32
      %19 = vector.broadcast %c0_i32_18 : i32 to vector<64x3xi32>
      %20 = arith.cmpi eq, %18, %19 : vector<64x3xi32>
      %c1_i32 = arith.constant 1 : i32
      %21 = vector.broadcast %c1_i32 : i32 to vector<64x3xi32>
      %22 = arith.cmpi eq, %18, %21 : vector<64x3xi32>
      %cst_19 = arith.constant -0.48480919 : f32
      %23 = arith.mulf %17, %cst_19 : f32
      %cst_20 = arith.constant 0.87461996 : f32
      %24 = arith.mulf %17, %cst_20 : f32
      %25 = vector.broadcast %23 : f32 to vector<64x3xf32>
      %26 = vector.broadcast %24 : f32 to vector<64x3xf32>
      %27 = arith.select %22, %25, %26 : vector<64x3xi1>, vector<64x3xf32>
      %28 = vector.broadcast %16 : f32 to vector<64x3xf32>
      %29 = arith.select %20, %28, %27 : vector<64x3xi1>, vector<64x3xf32>
      %c0_21 = arith.constant 0 : index
      %c0_22 = arith.constant 0 : index
      %30 = vector.load %arg3[%c0_21, %c0_22] : memref<64x3xf32, #tpu.memory_space<vmem>>, vector<64x3xf32>
      %31 = arith.addf %30, %29 : vector<64x3xf32>
      %c96 = arith.constant 96 : index
      %c0_23 = arith.constant 0 : index
      %32 = vector.load %arg5[%c96, %c0_23] : memref<160x3xf32, #tpu.memory_space<vmem>>, vector<64x3xf32>
      tpu.vector_store %arg5[%c96, %c0_23], %31 {strides = array<i32>} : memref<160x3xf32, #tpu.memory_space<vmem>>, vector<64x3xf32>,
    } else {
    }
    %c0 = arith.constant 0 : index
    %c0_1 = arith.constant 0 : index
    %c0_2 = arith.constant 0 : index
    %c0_3 = arith.constant 0 : index
    %3 = vector.load %arg4[%c0, %c0_1, %c0_2, %c0_3] : memref<1x16x8x512xf32, #tpu.memory_space<vmem>>, vector<1x16x8x512xf32>
    %4 = vector.shape_cast %3 : vector<1x16x8x512xf32> to vector<16x8x512xf32>
    %c0_4 = arith.constant 0 : index
    %c0_5 = arith.constant 0 : index
    %5 = vector.load %arg7[%c0_4, %c0_5] : memref<8x512xf32, #tpu.memory_space<vmem>>, vector<8x512xf32>
    %cst = arith.constant dense<0.000000e+00> : vector<8x512xf32>
    %6 = vector.multi_reduction <add>, %4, %cst [0] : vector<16x8x512xf32> to vector<8x512xf32>
    %7 = arith.addf %5, %6 : vector<8x512xf32>
    %c0_6 = arith.constant 0 : index
    %c0_7 = arith.constant 0 : index
    %8 = vector.load %arg7[%c0_6, %c0_7] : memref<8x512xf32, #tpu.memory_space<vmem>>, vector<8x512xf32>
    tpu.vector_store %arg7[%c0_6, %c0_7], %7 {strides = array<i32>} : memref<8x512xf32, #tpu.memory_space<vmem>>, vector<8x512xf32>,
    %c0_i32_8 = arith.constant 0 : i32
    %9 = arith.cmpi eq, %arg0, %c0_i32_8 : i32
    %10 = arith.extui %9 : i1 to i32
    %c0_i32_9 = arith.constant 0 : i32
    %11 = arith.cmpi ne, %10, %c0_i32_9 : i32
    scf.if %11 {
      %12 = tpu.iota {dimensions = array<i32: 1>} : vector<8x512xi32>
      %c4_i32 = arith.constant 4 : i32
      %c0_i32_10 = arith.constant 0 : i32
      %13 = arith.cmpi eq, %c4_i32, %c0_i32_10 : i32
      %c1_i32 = arith.constant 1 : i32
      %14 = arith.select %13, %c1_i32, %c4_i32 : i32
      %15 = vector.broadcast %14 : i32 to vector<8x512xi32>
      %16 = arith.remsi %12, %15 : vector<8x512xi32>
      %c0_i32_11 = arith.constant 0 : i32
      %17 = vector.broadcast %c0_i32_11 : i32 to vector<8x512xi32>
      %18 = arith.cmpi ne, %16, %17 : vector<8x512xi32>
      %c0_i32_12 = arith.constant 0 : i32
      %19 = vector.broadcast %c0_i32_12 : i32 to vector<8x512xi32>
      %20 = arith.cmpi slt, %16, %19 : vector<8x512xi32>
      %c0_i32_13 = arith.constant 0 : i32
      %21 = arith.cmpi slt, %14, %c0_i32_13 : i32
      %22 = vector.broadcast %21 : i1 to vector<8x512xi1>
      %23 = vector.broadcast %22 : vector<8x512xi1> to vector<8x512xi1>
      %24 = arith.xori %20, %23 : vector<8x512xi1>
      %25 = arith.andi %24, %18 : vector<8x512xi1>
      %26 = vector.broadcast %14 : i32 to vector<8x512xi32>
      %27 = arith.addi %16, %26 : vector<8x512xi32>
      %28 = arith.select %25, %27, %16 : vector<8x512xi1>, vector<8x512xi32>
      %c3_i32 = arith.constant 3 : i32
      %29 = vector.broadcast %c3_i32 : i32 to vector<8x512xi32>
      %30 = arith.cmpi slt, %28, %29 : vector<8x512xi32>
      %cst_14 = arith.constant -1.000000e+00 : f32
      %cst_15 = arith.constant 0.000000e+00 : f32
      %31 = vector.broadcast %cst_14 : f32 to vector<8x512xf32>
      %32 = vector.broadcast %cst_15 : f32 to vector<8x512xf32>
      %33 = arith.select %30, %31, %32 : vector<8x512xi1>, vector<8x512xf32>
      %c0_16 = arith.constant 0 : index
      %c0_17 = arith.constant 0 : index
      %34 = vector.load %arg7[%c0_16, %c0_17] : memref<8x512xf32, #tpu.memory_space<vmem>>, vector<8x512xf32>
      %35 = arith.mulf %34, %33 : vector<8x512xf32>
      %36 = vector.shape_cast %35 : vector<8x512xf32> to vector<1x8x512xf32>
      %cst_18 = arith.constant dense<0.000000e+00> : vector<1xf32>
      %37 = vector.multi_reduction <add>, %36, %cst_18 [1, 2] : vector<1x8x512xf32> to vector<1xf32>
      %38 = vector.shape_cast %37 : vector<1xf32> to vector<1x1x1xf32>
      %39 = vector.extract %38[0, 0, 0] : f32 from vector<1x1x1xf32>
      %c0_19 = arith.constant 0 : index
      %c0_20 = arith.constant 0 : index
      %40 = memref.load %arg6[%c0_19, %c0_20] : memref<1x1xf32, #tpu.memory_space<smem>>
      memref.store %39, %arg6[%c0_19, %c0_20] : memref<1x1xf32, #tpu.memory_space<smem>>
    } else {
    }
    return
  }
  func.func @transform_0(%arg0: i32) -> i32 {
    %c0_i32 = arith.constant 0 : i32
    %c0_i32_0 = arith.constant 0 : i32
    return %c0_i32 : i32
  }
  func.func @transform_1(%arg0: i32) -> (i32, i32) {
    %c0_i32 = arith.constant 0 : i32
    %c0_i32_0 = arith.constant 0 : i32
    %c0_i32_1 = arith.constant 0 : i32
    return %c0_i32, %c0_i32_0 : i32, i32
  }
  func.func @transform_2(%arg0: i32) -> (i32, i32) {
    %c0_i32 = arith.constant 0 : i32
    %c0_i32_0 = arith.constant 0 : i32
    %c0_i32_1 = arith.constant 0 : i32
    return %c0_i32, %c0_i32_0 : i32, i32
  }
  func.func @transform_3(%arg0: i32) -> (i32, i32, i32, i32) {
    %c0_i32 = arith.constant 0 : i32
    %c0_i32_0 = arith.constant 0 : i32
    %c0_i32_1 = arith.constant 0 : i32
    %c0_i32_2 = arith.constant 0 : i32
    return %c0_i32, %arg0, %c0_i32_0, %c0_i32_1 : i32, i32, i32, i32
  }
  func.func @transform_4(%arg0: i32) -> (i32, i32) {
    %c0_i32 = arith.constant 0 : i32
    %c0_i32_0 = arith.constant 0 : i32
    %c0_i32_1 = arith.constant 0 : i32
    return %c0_i32, %c0_i32_0 : i32, i32
  }
  func.func @transform_5(%arg0: i32) -> (i32, i32) {
    %c0_i32 = arith.constant 0 : i32
    %c0_i32_0 = arith.constant 0 : i32
    %c0_i32_1 = arith.constant 0 : i32
    return %c0_i32, %c0_i32_0 : i32, i32
  }
}

</mosaic_0001>

<llo_original>
// kernel: tpu_custom_call.1
$region0: #{tpu_custom_call.1}
  #allocation0 [shape = 'u32[]', space=smem, size = 0x4, offset = 0x4, fixed_abs, tag = 'smem constant byte address 0x4 - core index']
  #allocation1 [shape = 'u32[144,128]{1,0:T(1,128)}', space=vmem, size = 0x12000, scoped, tag = 'internal scratch']
  #allocation2 [shape = 'f32[8,512]{1,0:T(8,128)}', space=vmem, size = 0x4000, scoped, tag = 'scratch operand']
  %s0 = inlined_call_operand.vmem [shape: f32[2], index: 0, kind: input, shape index: {}]
  %s1 = inlined_call_operand.vmem [shape: f32[96,3], index: 1, kind: input, shape index: {}]
  %s2 = inlined_call_operand.vmem [shape: f32[64,3], index: 2, kind: input, shape index: {}]
  %s3 = inlined_call_operand.hbm [shape: f32[1,16,8,512], index: 3, kind: input, shape index: {}]
  %s4 = inlined_call_operand.vmem [shape: f32[160,3], index: 4, kind: output, shape index: {0}]
  %s5 = inlined_call_operand.hbm [shape: f32[1,1], index: 5, kind: output, shape index: {1}]
  %6 = xla_tuple %s4, %s5
  %s7 = sld [smem:[#allocation0]]
  $region50: #{tpu_custom_call.1} parent=0
    _
  %s9 = ssub.s32 1, %s7
  %s10 = scalar_select 0, %s9, %s7
  $region1: #{tpu_custom_call.1} parent=0
    #allocation3 [shape = 'u8[512]{0}', space=smem, size = 0x200, scoped, tag = 'input window, operand 0, single buffered']
    #allocation4 [shape = 's32[1]{0}', space=sflag, size = 0x4, scoped, tag = 'scoped memory for tpu_custom_call.1']
    #allocation5 [shape = 's32[1]{0}', space=sflag, size = 0x4, scoped, tag = 'scoped memory for tpu_custom_call.1']
    #allocation6 [shape = 's32[1]{0}', space=sflag, size = 0x4, scoped, tag = 'scoped memory for tpu_custom_call.1']
    #allocation7 [shape = 'u8[262144]{0}', space=vmem, size = 0x40000, scoped, tag = 'input window, operand 3, single buffered']
    #allocation8 [shape = 'u8[512]{0}', space=smem, size = 0x200, scoped, tag = 'output window, operand 1, single buffered']
    %11 = vsyncpa [#allocation6], 0
    %12 = vsyncpa [#allocation4], 0
    %13 = vsyncpa [#allocation5], 0
    // Predicated region
    $region2: #{tpu_custom_call.1} parent=1 // pred_check
      _
    $region3: #{tpu_custom_call.1} parent=1 // pred_check_branch
      %15 = sbr.rel (0) target = $region5
    $region4: #{tpu_custom_call.1} parent=1 // pred_region
      %s17 = ssub.s32 16, 16
      %18 = vsyncadd [#allocation6], %s17
      %s20 = sshll.u32 %s0, 4
      %s21 = int_to_ptr.vmem [resolvable:$true] %s20
      %23 = dma.vmem_to_smem %s21, 16, [#allocation3], [#allocation6]
    $region5: #{tpu_custom_call.1} parent=1 // pred_fallthru
      _
    // Predicated region
    $region6: #{tpu_custom_call.1} parent=1 // pred_check
      _
    $region7: #{tpu_custom_call.1} parent=1 // pred_check_branch
      %25 = sbr.rel (0) target = $region9
    $region8: #{tpu_custom_call.1} parent=1 // pred_region
      _
    $region9: #{tpu_custom_call.1} parent=1 // pred_fallthru
      _
    // Predicated region
    $region10: #{tpu_custom_call.1} parent=1 // pred_check
      _
    $region11: #{tpu_custom_call.1} parent=1 // pred_check_branch
      %27 = sbr.rel (0) target = $region13
    $region12: #{tpu_custom_call.1} parent=1 // pred_region
      _
    $region13: #{tpu_custom_call.1} parent=1 // pred_fallthru
      _
    // Predicated region
    $region14: #{tpu_custom_call.1} parent=1 // pred_check
      _
    $region15: #{tpu_custom_call.1} parent=1 // pred_check_branch
      %29 = sbr.rel (0) target = $region17
    $region16: #{tpu_custom_call.1} parent=1 // pred_region
      %s31 = ssub.s32 8192, 8192
      %32 = vsyncadd [#allocation4], %s31
      %s33 = sshll.u32 [#allocation7], 4
      %s34 = int_to_ptr.vmem [resolvable:$true] %s33
      %39 = dma.hbm_to_vmem [thread:$0]  %s3, 8192, %s34, [#allocation4], 512, 512, 32
    $region17: #{tpu_custom_call.1} parent=1 // pred_fallthru
      _
    // Predicated region
    $region18: #{tpu_custom_call.1} parent=1 // pred_check
      _
    $region19: #{tpu_custom_call.1} parent=1 // pred_check_branch
      %41 = sbr.rel (0) target = $region21
    $region20: #{tpu_custom_call.1} parent=1 // pred_region
      %42 = dma.done [#allocation6], 16
    $region21: #{tpu_custom_call.1} parent=1 // pred_fallthru
      _
    // Predicated region
    $region22: #{tpu_custom_call.1} parent=1 // pred_check
      _
    $region23: #{tpu_custom_call.1} parent=1 // pred_check_branch
      %44 = sbr.rel (0) target = $region25
    $region24: #{tpu_custom_call.1} parent=1 // pred_region
      %45 = dma.done [#allocation4], 8192
    $region25: #{tpu_custom_call.1} parent=1 // pred_fallthru
      _
    %46 = sfence
    %p47 = scmp.eq.s32.totalorder 0, 0
    // Predicated region
    $region26: #{tpu_custom_call.1} parent=1 // pred_check
      %p48 = pneg %p47
    $region27: #{tpu_custom_call.1} parent=1 // pred_check_branch
      %50 = sbr.rel (%p48) target = $region29
    $region28: #{tpu_custom_call.1} parent=1 // pred_region
      %51 = vst [vmem:[#allocation2] sm:$0xff] 0.0
      %52 = vst [vmem:[#allocation2 + $0x8] sm:$0xff] 0.0
      %53 = vst [vmem:[#allocation2 + $0x10] sm:$0xff] 0.0
      %54 = vst [vmem:[#allocation2 + $0x18] sm:$0xff] 0.0
      %v55 = vld [vmem:[%s1] sm:$0xff]
      %v56 = vld [vmem:[%s1 + $0x8] sm:$0xff]
      %v57 = vld [vmem:[%s1 + $0x10] sm:$0xff]
      %v58 = vld [vmem:[%s1 + $0x18] sm:$0xff]
      %v59 = vld [vmem:[%s1 + $0x20] sm:$0xff]
      %v60 = vld [vmem:[%s1 + $0x28] sm:$0xff]
      %v61 = vld [vmem:[%s1 + $0x30] sm:$0xff]
      %v62 = vld [vmem:[%s1 + $0x38] sm:$0xff]
      %v63 = vld [vmem:[%s1 + $0x40] sm:$0xff]
      %v64 = vld [vmem:[%s1 + $0x48] sm:$0xff]
      %v65 = vld [vmem:[%s1 + $0x50] sm:$0xff]
      %v66 = vld [vmem:[%s1 + $0x58] sm:$0xff]
      %vm67 = vcmask 23552
      %68 = vst.msk [vmem:[%s4] sm:$0xff] %vm67, %v55
      %69 = vst.msk [vmem:[%s4 + $0x8] sm:$0xff] %vm67, %v56
      %70 = vst.msk [vmem:[%s4 + $0x10] sm:$0xff] %vm67, %v57
      %71 = vst.msk [vmem:[%s4 + $0x18] sm:$0xff] %vm67, %v58
      %72 = vst.msk [vmem:[%s4 + $0x20] sm:$0xff] %vm67, %v59
      %73 = vst.msk [vmem:[%s4 + $0x28] sm:$0xff] %vm67, %v60
      %74 = vst.msk [vmem:[%s4 + $0x30] sm:$0xff] %vm67, %v61
      %75 = vst.msk [vmem:[%s4 + $0x38] sm:$0xff] %vm67, %v62
      %76 = vst.msk [vmem:[%s4 + $0x40] sm:$0xff] %vm67, %v63
      %77 = vst.msk [vmem:[%s4 + $0x48] sm:$0xff] %vm67, %v64
      %78 = vst.msk [vmem:[%s4 + $0x50] sm:$0xff] %vm67, %v65
      %79 = vst.msk [vmem:[%s4 + $0x58] sm:$0xff] %vm67, %v66
      %s80 = sld [smem:[#allocation3]]
      %s81 = sld [smem:[#allocation3 + $0x1]]
      %v82 = vlaneseq
      %v83 = vand.u32 %v82, 127
      %vm84 = vcmp.eq.s32.totalorder %v83, 0
      %vm85 = vcmp.eq.s32.totalorder %v83, 1
      %s86 = smul.f32 %s81, -0.4848092
      %s87 = smul.f32 %s81, 0.87461996
      %v88 = vstv %s86
      %v89 = vstv %s87
      %v90 = vsel %vm85, %v88, %v89
      %v91 = vstv %s80
      %v92 = vsel %vm84, %v91, %v90
      %v93 = vld [vmem:[%s2] sm:$0xff]
      %v94 = vld [vmem:[%s2 + $0x8] sm:$0xff]
      %v95 = vld [vmem:[%s2 + $0x10] sm:$0xff]
      %v96 = vld [vmem:[%s2 + $0x18] sm:$0xff]
      %v97 = vld [vmem:[%s2 + $0x20] sm:$0xff]
      %v98 = vld [vmem:[%s2 + $0x28] sm:$0xff]
      %v99 = vld [vmem:[%s2 + $0x30] sm:$0xff]
      %v100 = vld [vmem:[%s2 + $0x38] sm:$0xff]
      %v101 = vadd.f32 %v93, %v92
      %v102 = vadd.f32 %v94, %v92
      %v103 = vadd.f32 %v95, %v92
      %v104 = vadd.f32 %v96, %v92
      %v105 = vadd.f32 %v97, %v92
      %v106 = vadd.f32 %v98, %v92
      %v107 = vadd.f32 %v99, %v92
      %v108 = vadd.f32 %v100, %v92
      %109 = vst.msk [vmem:[%s4 + $0x60] sm:$0xff] %vm67, %v101
      %110 = vst.msk [vmem:[%s4 + $0x68] sm:$0xff] %vm67, %v102
      %111 = vst.msk [vmem:[%s4 + $0x70] sm:$0xff] %vm67, %v103
      %112 = vst.msk [vmem:[%s4 + $0x78] sm:$0xff] %vm67, %v104
      %113 = vst.msk [vmem:[%s4 + $0x80] sm:$0xff] %vm67, %v105
      %114 = vst.msk [vmem:[%s4 + $0x88] sm:$0xff] %vm67, %v106
      %115 = vst.msk [vmem:[%s4 + $0x90] sm:$0xff] %vm67, %v107
      %116 = vst.msk [vmem:[%s4 + $0x98] sm:$0xff] %vm67, %v108
    $region29: #{tpu_custom_call.1} parent=1 // pred_fallthru
      _
    %v117 = vld [vmem:[#allocation7] sm:$0xff]
    %v118 = vld [vmem:[#allocation7 + $0x8] sm:$0xff]
    %v119 = vld [vmem:[#allocation7 + $0x10] sm:$0xff]
    %v120 = vld [vmem:[#allocation7 + $0x18] sm:$0xff]
    %v121 = vld [vmem:[#allocation7 + $0x20] sm:$0xff]
    %v122 = vld [vmem:[#allocation7 + $0x28] sm:$0xff]
    %v123 = vld [vmem:[#allocation7 + $0x30] sm:$0xff]
    %v124 = vld [vmem:[#allocation7 + $0x38] sm:$0xff]
    %v125 = vld [vmem:[#allocation7 + $0x40] sm:$0xff]
    %v126 = vld [vmem:[#allocation7 + $0x48] sm:$0xff]
    %v127 = vld [vmem:[#allocation7 + $0x50] sm:$0xff]
    %v128 = vld [vmem:[#allocation7 + $0x58] sm:$0xff]
    %v129 = vld [vmem:[#allocation7 + $0x60] sm:$0xff]
    %v130 = vld [vmem:[#allocation7 + $0x68] sm:$0xff]
    %v131 = vld [vmem:[#allocation7 + $0x70] sm:$0xff]
    %v132 = vld [vmem:[#allocation7 + $0x78] sm:$0xff]
    %v133 = vld [vmem:[#allocation7 + $0x80] sm:$0xff]
    %v134 = vld [vmem:[#allocation7 + $0x88] sm:$0xff]
    %v135 = vld [vmem:[#allocation7 + $0x90] sm:$0xff]
    %v136 = vld [vmem:[#allocation7 + $0x98] sm:$0xff]
    %v137 = vld [vmem:[#allocation7 + $0xa0] sm:$0xff]
    %v138 = vld [vmem:[#allocation7 + $0xa8] sm:$0xff]
    %v139 = vld [vmem:[#allocation7 + $0xb0] sm:$0xff]
    %v140 = vld [vmem:[#allocation7 + $0xb8] sm:$0xff]
    %v141 = vld [vmem:[#allocation7 + $0xc0] sm:$0xff]
    %v142 = vld [vmem:[#allocation7 + $0xc8] sm:$0xff]
    %v143 = vld [vmem:[#allocation7 + $0xd0] sm:$0xff]
    %v144 = vld [vmem:[#allocation7 + $0xd8] sm:$0xff]
    %v145 = vld [vmem:[#allocation7 + $0xe0] sm:$0xff]
    %v146 = vld [vmem:[#allocation7 + $0xe8] sm:$0xff]
    %v147 = vld [vmem:[#allocation7 + $0xf0] sm:$0xff]
    %v148 = vld [vmem:[#allocation7 + $0xf8] sm:$0xff]
    %v149 = vld [vmem:[#allocation7 + $0x100] sm:$0xff]
    %v150 = vld [vmem:[#allocation7 + $0x108] sm:$0xff]
    %v151 = vld [vmem:[#allocation7 + $0x110] sm:$0xff]
    %v152 = vld [vmem:[#allocation7 + $0x118] sm:$0xff]
    %v153 = vld [vmem:[#allocation7 + $0x120] sm:$0xff]
    %v154 = vld [vmem:[#allocation7 + $0x128] sm:$0xff]
    %v155 = vld [vmem:[#allocation7 + $0x130] sm:$0xff]
    %v156 = vld [vmem:[#allocation7 + $0x138] sm:$0xff]
    %v157 = vld [vmem:[#allocation7 + $0x140] sm:$0xff]
    %v158 = vld [vmem:[#allocation7 + $0x148] sm:$0xff]
    %v159 = vld [vmem:[#allocation7 + $0x150] sm:$0xff]
    %v160 = vld [vmem:[#allocation7 + $0x158] sm:$0xff]
    %v161 = vld [vmem:[#allocation7 + $0x160] sm:$0xff]
    %v162 = vld [vmem:[#allocation7 + $0x168] sm:$0xff]
    %v163 = vld [vmem:[#allocation7 + $0x170] sm:$0xff]
    %v164 = vld [vmem:[#allocation7 + $0x178] sm:$0xff]
    %v165 = vld [vmem:[#allocation7 + $0x180] sm:$0xff]
    %v166 = vld [vmem:[#allocation7 + $0x188] sm:$0xff]
    %v167 = vld [vmem:[#allocation7 + $0x190] sm:$0xff]
    %v168 = vld [vmem:[#allocation7 + $0x198] sm:$0xff]
    %v169 = vld [vmem:[#allocation7 + $0x1a0] sm:$0xff]
    %v170 = vld [vmem:[#allocation7 + $0x1a8] sm:$0xff]
    %v171 = vld [vmem:[#allocation7 + $0x1b0] sm:$0xff]
    %v172 = vld [vmem:[#allocation7 + $0x1b8] sm:$0xff]
    %v173 = vld [vmem:[#allocation7 + $0x1c0] sm:$0xff]
    %v174 = vld [vmem:[#allocation7 + $0x1c8] sm:$0xff]
    %v175 = vld [vmem:[#allocation7 + $0x1d0] sm:$0xff]
    %v176 = vld [vmem:[#allocation7 + $0x1d8] sm:$0xff]
    %v177 = vld [vmem:[#allocation7 + $0x1e0] sm:$0xff]
    %v178 = vld [vmem:[#allocation7 + $0x1e8] sm:$0xff]
    %v179 = vld [vmem:[#allocation7 + $0x1f0] sm:$0xff]
    %v180 = vld [vmem:[#allocation7 + $0x1f8] sm:$0xff]
    %v181 = vld [vmem:[#allocation2] sm:$0xff]
    %v182 = vld [vmem:[#allocation2 + $0x8] sm:$0xff]
    %v183 = vld [vmem:[#allocation2 + $0x10] sm:$0xff]
    %v184 = vld [vmem:[#allocation2 + $0x18] sm:$0xff]
    %v185 = vadd.f32 %v117, %v121
    %v186 = vadd.f32 %v185, %v125
    %v187 = vadd.f32 %v186, %v129
    %v188 = vadd.f32 %v187, %v133
    %v189 = vadd.f32 %v188, %v137
    %v190 = vadd.f32 %v189, %v141
    %v191 = vadd.f32 %v190, %v145
    %v192 = vadd.f32 %v191, %v149
    %v193 = vadd.f32 %v192, %v153
    %v194 = vadd.f32 %v193, %v157
    %v195 = vadd.f32 %v194, %v161
    %v196 = vadd.f32 %v195, %v165
    %v197 = vadd.f32 %v196, %v169
    %v198 = vadd.f32 %v197, %v173
    %v199 = vadd.f32 %v198, %v177
    %v200 = vadd.f32 %v118, %v122
    %v201 = vadd.f32 %v200, %v126
    %v202 = vadd.f32 %v201, %v130
    %v203 = vadd.f32 %v202, %v134
    %v204 = vadd.f32 %v203, %v138
    %v205 = vadd.f32 %v204, %v142
    %v206 = vadd.f32 %v205, %v146
    %v207 = vadd.f32 %v206, %v150
    %v208 = vadd.f32 %v207, %v154
    %v209 = vadd.f32 %v208, %v158
    %v210 = vadd.f32 %v209, %v162
    %v211 = vadd.f32 %v210, %v166
    %v212 = vadd.f32 %v211, %v170
    %v213 = vadd.f32 %v212, %v174
    %v214 = vadd.f32 %v213, %v178
    %v215 = vadd.f32 %v119, %v123
    %v216 = vadd.f32 %v215, %v127
    %v217 = vadd.f32 %v216, %v131
    %v218 = vadd.f32 %v217, %v135
    %v219 = vadd.f32 %v218, %v139
    %v220 = vadd.f32 %v219, %v143
    %v221 = vadd.f32 %v220, %v147
    %v222 = vadd.f32 %v221, %v151
    %v223 = vadd.f32 %v222, %v155
    %v224 = vadd.f32 %v223, %v159
    %v225 = vadd.f32 %v224, %v163
    %v226 = vadd.f32 %v225, %v167
    %v227 = vadd.f32 %v226, %v171
    %v228 = vadd.f32 %v227, %v175
    %v229 = vadd.f32 %v228, %v179
    %v230 = vadd.f32 %v120, %v124
    %v231 = vadd.f32 %v230, %v128
    %v232 = vadd.f32 %v231, %v132
    %v233 = vadd.f32 %v232, %v136
    %v234 = vadd.f32 %v233, %v140
    %v235 = vadd.f32 %v234, %v144
    %v236 = vadd.f32 %v235, %v148
    %v237 = vadd.f32 %v236, %v152
    %v238 = vadd.f32 %v237, %v156
    %v239 = vadd.f32 %v238, %v160
    %v240 = vadd.f32 %v239, %v164
    %v241 = vadd.f32 %v240, %v168
    %v242 = vadd.f32 %v241, %v172
    %v243 = vadd.f32 %v242, %v176
    %v244 = vadd.f32 %v243, %v180
    %v245 = vadd.f32 %v181, %v199
    %v246 = vadd.f32 %v182, %v214
    %v247 = vadd.f32 %v183, %v229
    %v248 = vadd.f32 %v184, %v244
    %249 = vst [vmem:[#allocation2] sm:$0xff] %v245
    %250 = vst [vmem:[#allocation2 + $0x8] sm:$0xff] %v246
    %251 = vst [vmem:[#allocation2 + $0x10] sm:$0xff] %v247
    %252 = vst [vmem:[#allocation2 + $0x18] sm:$0xff] %v248
    // Predicated region
    $region30: #{tpu_custom_call.1} parent=1 // pred_check
      %p253 = pneg %p47
    $region31: #{tpu_custom_call.1} parent=1 // pred_check_branch
      %255 = sbr.rel (%p253) target = $region33
    $region32: #{tpu_custom_call.1} parent=1 // pred_region
      %v256 = vlaneseq
      %v257 = vand.u32 %v256, 127
      %v258 = vadd.s32 %v257, 128
      %v259 = vadd.s32 %v257, 256
      %v260 = vadd.s32 %v257, 384
      %vm261 = vcmp.lt.s32.totalorder %v257, 0
      %v262 = vsub.s32 0, %v257
      %v263 = vsel %vm261, %v262, %v257
      %v264 = vshrl.u32 %v263, 2
      %v265 = vand.u32 %v263, 3
      %v266 = vsub.s32 0, %v265
      %v267 = vsel %vm261, %v266, %v265
      %vm268 = vcmp.lt.s32.totalorder %v258, 0
      %v269 = vsub.s32 0, %v258
      %v270 = vsel %vm268, %v269, %v258
      %v271 = vshrl.u32 %v270, 2
      %v272 = vand.u32 %v270, 3
      %v273 = vsub.s32 0, %v272
      %v274 = vsel %vm268, %v273, %v272
      %vm275 = vcmp.lt.s32.totalorder %v259, 0
      %v276 = vsub.s32 0, %v259
      %v277 = vsel %vm275, %v276, %v259
      %v278 = vshrl.u32 %v277, 2
      %v279 = vand.u32 %v277, 3
      %v280 = vsub.s32 0, %v279
      %v281 = vsel %vm275, %v280, %v279
      %vm282 = vcmp.lt.s32.totalorder %v260, 0
      %v283 = vsub.s32 0, %v260
      %v284 = vsel %vm282, %v283, %v260
      %v285 = vshrl.u32 %v284, 2
      %v286 = vand.u32 %v284, 3
      %v287 = vsub.s32 0, %v286
      %v288 = vsel %vm282, %v287, %v286
      %vm289 = vcmp.ne.s32.totalorder %v267, 0
      %vm290 = vcmp.ne.s32.totalorder %v274, 0
      %vm291 = vcmp.ne.s32.totalorder %v281, 0
      %vm292 = vcmp.ne.s32.totalorder %v288, 0
      %vm293 = vcmp.lt.s32.totalorder %v267, 0
      %vm294 = vcmp.lt.s32.totalorder %v274, 0
      %vm295 = vcmp.lt.s32.totalorder %v281, 0
      %vm296 = vcmp.lt.s32.totalorder %v288, 0
      %vm297 = vmand %vm293, %vm289
      %vm298 = vmand %vm294, %vm290
      %vm299 = vmand %vm295, %vm291
      %vm300 = vmand %vm296, %vm292
      %v301 = vadd.s32 %v267, 4
      %v302 = vadd.s32 %v274, 4
      %v303 = vadd.s32 %v281, 4
      %v304 = vadd.s32 %v288, 4
      %v305 = vsel %vm297, %v301, %v267
      %v306 = vsel %vm298, %v302, %v274
      %v307 = vsel %vm299, %v303, %v281
      %v308 = vsel %vm300, %v304, %v288
      %vm309 = vcmp.lt.s32.totalorder %v305, 3
      %vm310 = vcmp.lt.s32.totalorder %v306, 3
      %vm311 = vcmp.lt.s32.totalorder %v307, 3
      %vm312 = vcmp.lt.s32.totalorder %v308, 3
      %v313 = vsel %vm309, -1.0, 0.0
      %v314 = vsel %vm310, -1.0, 0.0
      %v315 = vsel %vm311, -1.0, 0.0
      %v316 = vsel %vm312, -1.0, 0.0
      %v317 = vld [vmem:[#allocation2] sm:$0xff]
      %v318 = vld [vmem:[#allocation2 + $0x8] sm:$0xff]
      %v319 = vld [vmem:[#allocation2 + $0x10] sm:$0xff]
      %v320 = vld [vmem:[#allocation2 + $0x18] sm:$0xff]
      %v321 = vmul.f32 %v317, %v313
      %v322 = vmul.f32 %v318, %v314
      %v323 = vmul.f32 %v319, %v315
      %v324 = vmul.f32 %v320, %v316
      %v325 = vadd.f32 %v321, %v322
      %v326 = vadd.f32 %v325, %v323
      %v327 = vadd.f32 %v326, %v324
      %328 = vadd.xlane.f32.xlu0 %v327
      %v329 = vpop.xlane.xlu0 %328
      %v330 = vrot.slane %v329, 4
      %v331 = vadd.f32 %v329, %v330
      %v332 = vrot.slane %v331, 2
      %v333 = vadd.f32 %v331, %v332
      %v334 = vrot.slane %v333, 1
      %v335 = vadd.f32 %v333, %v334
      %s336 = vtos %v335
      %s337 = scalar_lea.smem [#allocation8], 0
      %338 = sst [smem:[%s337]] %s336
    $region33: #{tpu_custom_call.1} parent=1 // pred_fallthru
      _
    // Predicated region
    $region34: #{tpu_custom_call.1} parent=1 // pred_check
      _
    $region35: #{tpu_custom_call.1} parent=1 // pred_check_branch
      %340 = sbr.rel (0) target = $region37
    $region36: #{tpu_custom_call.1} parent=1 // pred_region
      _
    $region37: #{tpu_custom_call.1} parent=1 // pred_fallthru
      _
    // Predicated region
    $region38: #{tpu_custom_call.1} parent=1 // pred_check
      _
    $region39: #{tpu_custom_call.1} parent=1 // pred_check_branch
      %342 = sbr.rel (0) target = $region41
    $region40: #{tpu_custom_call.1} parent=1 // pred_region
      %s344 = ssub.s32 16, 16
      %345 = vsyncadd [#allocation5], %s344
      %348 = dma.smem_to_hbm [#allocation8], 16, %s5, [#allocation5]
    $region41: #{tpu_custom_call.1} parent=1 // pred_fallthru
      _
    // Predicated region
    $region42: #{tpu_custom_call.1} parent=1 // pred_check
      _
    $region43: #{tpu_custom_call.1} parent=1 // pred_check_branch
      %350 = sbr.rel (0) target = $region45
    $region44: #{tpu_custom_call.1} parent=1 // pred_region
      _
    $region45: #{tpu_custom_call.1} parent=1 // pred_fallthru
      _
    // Predicated region
    $region46: #{tpu_custom_call.1} parent=1 // pred_check
      _
    $region47: #{tpu_custom_call.1} parent=1 // pred_check_branch
      %352 = sbr.rel (0) target = $region49
    $region48: #{tpu_custom_call.1} parent=1 // pred_region
      %353 = dma.done [#allocation5], 16
    $region49: #{tpu_custom_call.1} parent=1 // pred_fallthru
      _
    %354 = sfence
    %355 = vsyncpa [#allocation4], 1
    %356 = vsyncpa [#allocation5], 1
    %357 = vsyncpa [#allocation6], 1

</llo_original>
